<compile_context>
chip_gen: v6e
topology: v6e:2x2x1
jax: 0.10.0
libtpu: 0.0.40
codegen_flags: <defaults>
</compile_context>

<pallas_src>
import jax
import jax.numpy as jnp
from jax.experimental import pallas as pl
from jax.experimental.pallas import tpu as pltpu


# ---------------------------------------------------------------------------
# Kernels
# ---------------------------------------------------------------------------

def _sae_kernel_acc_into_out(x_ref, w_enc_t_ref, b_enc_ref, w_dec_t_ref,
                             x_hat_ref, c_ref):
    """x_hat dtype == f32: accumulate directly into the resident output block."""
    n = pl.program_id(1)

    @pl.when(n == 0)
    def _init():
        x_hat_ref[...] = jnp.zeros_like(x_hat_ref)

    # Encoder tile: ReLU(x @ W_enc^T + b) -> [tb, tn] in f32 (MXU + VPU).
    pre = jnp.dot(x_ref[...], w_enc_t_ref[...],
                  preferred_element_type=jnp.float32)
    pre = pre + b_enc_ref[...].astype(jnp.float32)
    c = jnp.maximum(pre, 0.0)

    # Stream the dictionary activations out (lane-dense [tb, tn] store).
    c_ref[...] = c.astype(c_ref.dtype)

    # Decoder (weights already column-normalized at prep time): accumulate the
    # MXU contraction over the N grid axis into the resident f32 output block.
    x_hat_ref[...] += jnp.dot(c.astype(w_dec_t_ref.dtype), w_dec_t_ref[...],
                              preferred_element_type=jnp.float32)


def _sae_kernel_acc_scratch(x_ref, w_enc_t_ref, b_enc_ref, w_dec_t_ref,
                            x_hat_ref, c_ref, acc_ref):
    """x_hat dtype != f32 (e.g. bf16): accumulate in an f32 VMEM scratch."""
    n = pl.program_id(1)

    @pl.when(n == 0)
    def _init():
        acc_ref[...] = jnp.zeros_like(acc_ref)

    pre = jnp.dot(x_ref[...], w_enc_t_ref[...],
                  preferred_element_type=jnp.float32)
    pre = pre + b_enc_ref[...].astype(jnp.float32)
    c = jnp.maximum(pre, 0.0)
    c_ref[...] = c.astype(c_ref.dtype)
    acc_ref[...] += jnp.dot(c.astype(w_dec_t_ref.dtype), w_dec_t_ref[...],
                            preferred_element_type=jnp.float32)

    @pl.when(n == pl.num_programs(1) - 1)
    def _finalize():
        x_hat_ref[...] = acc_ref[...].astype(x_hat_ref.dtype)


# ---------------------------------------------------------------------------
# Parameter prep (one-time, at load time — NOT per call)
# ---------------------------------------------------------------------------

def _round_up(v, m):
    return (v + m - 1) // m * m


def sae_prepare_params(w_enc, b_enc, w_dec, *, compute_dtype=jnp.bfloat16,
                       lane_multiple=128):
    """One-time layout/dtype prep.

    w_enc: [N, D] (encoder Linear weight), b_enc: [N],
    w_dec: [D, N] (decoder Linear weight, bias=False).

    Returns (w_enc_t [D, Np] compute_dtype,
             b_enc   [1, Np] float32,
             w_dec_t [Np, D] compute_dtype  -- columns normalized & folded,
             N       original dict size)
    with Np = N rounded up to a multiple of `lane_multiple` (zero-padded dict
    columns contribute exactly zero to x_hat and are sliced off from c).
    """
    w_enc = jnp.asarray(w_enc)
    w_dec = jnp.asarray(w_dec)
    b_enc = jnp.asarray(b_enc)
    N, D = w_enc.shape
    Np = _round_up(N, lane_multiple)

    # Pre-transpose so both matmuls are plain (1,)x(0,) MXU contractions.
    w_enc_t = w_enc.T.astype(jnp.float32)                      # [D, N]
    w_dec_t = w_dec.T.astype(jnp.float32)                      # [N, D]

    # F.normalize(w_dec, dim=0): denominator = max(||column||_2, 1e-12).
    # Fold diag(1/||col||) into the decoder weight rows once, in f32.
    col_norm = jnp.sqrt(jnp.sum(jnp.square(w_dec_t), axis=1, keepdims=True))
    w_dec_t = w_dec_t / jnp.maximum(col_norm, 1e-12)

    b_enc2 = b_enc.astype(jnp.float32).reshape(1, N)

    if Np != N:
        w_enc_t = jnp.pad(w_enc_t, ((0, 0), (0, Np - N)))
        w_dec_t = jnp.pad(w_dec_t, ((0, Np - N), (0, 0)))
        b_enc2 = jnp.pad(b_enc2, ((0, 0), (0, Np - N)))

    return (w_enc_t.astype(compute_dtype),
            b_enc2,                              # bias kept f32 (tiny, exact)
            w_dec_t.astype(compute_dtype),
            N)


# ---------------------------------------------------------------------------
# Tile selection (VMEM-budget driven, generation-aware)
# ---------------------------------------------------------------------------

def _vmem_capacity_bytes():
    try:
        info = pltpu.get_tpu_info()
        cap = getattr(info, "vmem_capacity_bytes", None)
        if cap:
            return int(cap)
    except Exception:
        pass
    return 64 * 1024 * 1024        # conservative default (v7x per-TC VMEM)


def _choose_tiles(B, D, Np, compute_isz, out_isz, c_isz, needs_scratch,
                  budget, tb_max=512):
    """Pick (tb, tn): tb amortizes weight re-streaming, tn fits the weight
    double-buffers + outputs in the VMEM budget, both lane/sublane aligned."""
    tb_align = 8 if (compute_isz == 4 and out_isz == 4 and c_isz == 4) else 16
    tb = min(tb_max, _round_up(B, tb_align))
    # v7x dual-TC: make sure the "parallel" batch axis has >= 2 tiles when the
    # batch allows it.
    if _round_up(B, tb) // tb < 2 and tb > tb_align:
        tb = max(tb_align, _round_up((B + 1) // 2, tb_align))

    while True:
        fixed = 2 * tb * D * compute_isz          # x tile (double-buffered)
        fixed += 2 * tb * D * out_isz             # x_hat tile
        if needs_scratch:
            fixed += tb * D * 4                   # f32 accumulator scratch
        per_tn = 4 * D * compute_isz + 2 * tb * c_isz   # both weights + c tile
        tn = (budget - fixed) // per_tn
        tn = int(tn) // 128 * 128
        if tn >= 128 or tb <= tb_align:
            break
        tb = max(tb_align, tb // 2)

    tn = max(128, min(tn, Np))
    while Np % tn != 0:            # Np is a multiple of 128, so 128 always works
        tn -= 128
    return tb, tn


# ---------------------------------------------------------------------------
# Forward
# ---------------------------------------------------------------------------

def sae_forward(x, params, *, out_dtype=None, c_dtype=None, tb=None, tn=None):
    """Tiled SAE forward. x: [B, D]. Returns (x_hat [B, D], c [B, N])."""
    w_enc_t, b_enc2, w_dec_t, N = params
    B, D = x.shape
    Np = w_enc_t.shape[1]
    compute_dtype = w_enc_t.dtype

    out_dtype = jnp.dtype(x.dtype if out_dtype is None else out_dtype)
    c_dtype = jnp.dtype(out_dtype if c_dtype is None else c_dtype)
    needs_scratch = out_dtype != jnp.dtype(jnp.float32)

    compute_isz = jnp.dtype(compute_dtype).itemsize
    out_isz = out_dtype.itemsize
    c_isz = c_dtype.itemsize

    # Generation-aware VMEM budget: ~48 MiB on v7x (64 MiB VMEM), ~96 MiB on
    # v5e/v6e (128 MiB VMEM); tiles sized to ~80% of that limit.
    vmem_cap = _vmem_capacity_bytes()
    vmem_limit = min(vmem_cap * 3 // 4, 100 * 1024 * 1024)
    budget = int(vmem_limit * 0.8)

    auto_tb, auto_tn = _choose_tiles(B, D, Np, compute_isz, out_isz, c_isz,
                                     needs_scratch, budget)
    tb = auto_tb if tb is None else tb
    tn = auto_tn if tn is None else tn
    assert tb % 8 == 0 and tn % 128 == 0 and Np % tn == 0

    Bp = _round_up(B, tb)
    # Per-call work on x only: cast to the compute dtype and pad the batch.
    x_p = x.astype(compute_dtype)
    if Bp != B:
        x_p = jnp.pad(x_p, ((0, Bp - B), (0, 0)))

    grid = (Bp // tb, Np // tn)

    # Advisory cost estimate: weights are re-streamed once per batch tile.
    w_bytes = (w_enc_t.size + w_dec_t.size) * compute_isz
    b_bytes = b_enc2.size * b_enc2.dtype.itemsize
    bytes_accessed = (x_p.size * compute_isz
                      + grid[0] * (w_bytes + b_bytes)
                      + Bp * D * out_isz + Bp * Np * c_isz)
    cost = pl.CostEstimate(flops=int(4 * Bp * Np * D),
                           transcendentals=0,
                           bytes_accessed=int(bytes_accessed))

    kernel = _sae_kernel_acc_scratch if needs_scratch else _sae_kernel_acc_into_out
    scratch = [pltpu.VMEM((tb, D), jnp.float32)] if needs_scratch else []

    x_hat_p, c_p = pl.pallas_call(
        kernel,
        out_shape=(
            jax.ShapeDtypeStruct((Bp, D), out_dtype),
            jax.ShapeDtypeStruct((Bp, Np), c_dtype),
        ),
        grid_spec=pltpu.PrefetchScalarGridSpec(
            num_scalar_prefetch=0,
            grid=grid,
            in_specs=[
                pl.BlockSpec((tb, D), lambda b, n: (b, 0)),    # x
                pl.BlockSpec((D, tn), lambda b, n: (0, n)),    # w_enc_t
                pl.BlockSpec((1, tn), lambda b, n: (0, n)),    # b_enc (f32)
                pl.BlockSpec((tn, D), lambda b, n: (n, 0)),    # w_dec_t (normalized)
            ],
            out_specs=[
                pl.BlockSpec((tb, D), lambda b, n: (b, 0)),    # x_hat (resident over n)
                pl.BlockSpec((tb, tn), lambda b, n: (b, n)),   # c
            ],
            scratch_shapes=scratch,
        ),
        compiler_params=pltpu.CompilerParams(
            dimension_semantics=("parallel", "arbitrary"),
            vmem_limit_bytes=int(vmem_limit),
        ),
        cost_estimate=cost,
    )(x_p, w_enc_t, b_enc2, w_dec_t)

    x_hat = x_hat_p[:B] if Bp != B else x_hat_p
    c = c_p[:B, :N] if (Bp, Np) != (B, N) else c_p
    return x_hat, c


# ---------------------------------------------------------------------------
# Pure-JAX reference mirroring the PyTorch forward
# ---------------------------------------------------------------------------

def sae_forward_ref(x, w_enc, b_enc, w_dec):
    c = jnp.maximum(x @ w_enc.T + b_enc[None, :], 0.0)
    col_norm = jnp.sqrt(jnp.sum(w_dec * w_dec, axis=0, keepdims=True))
    w_dn = w_dec / jnp.maximum(col_norm, 1e-12)
    x_hat = c @ w_dn.T
    return x_hat, c


# TODO(synk): loss()/train_batch()/configure_optimizers() are training-side
# utilities, not part of the forward pass, and are not implemented as kernels.

if __name__ == "__main__":
    # Small deterministic shapes consistent with the module:
    #   activation_size D = 256, n_dict_components N = 512, batch B = 16.
    B, D, N = 16, 256, 512
    key = jax.random.PRNGKey(0)
    kx, kwe, kbe, kwd = jax.random.split(key, 4)

    x = jax.random.normal(kx, (B, D), dtype=jnp.float32)
    # Encoder Linear(D -> N): weight [N, D], bias [N].
    w_enc = jax.random.normal(kwe, (N, D), dtype=jnp.float32) * (1.0 / jnp.sqrt(D))
    b_enc = jax.random.normal(kbe, (N,), dtype=jnp.float32) * 0.01
    # Decoder Linear(N -> D, bias=False): weight [D, N]. (The orthogonal init
    # is irrelevant to forward math — the weight is column-normalized.)
    w_dec = jax.random.normal(kwd, (D, N), dtype=jnp.float32)

    x_hat_ref, c_ref = sae_forward_ref(x, w_enc, b_enc, w_dec)

    # --- 1) f32 compute path, small explicit tiles: exercises the (b, n) grid
    #        and the accumulate-into-resident-output kernel; tight check. -----
    params_f32 = sae_prepare_params(w_enc, b_enc, w_dec,
                                    compute_dtype=jnp.float32)
    x_hat_a, c_a = sae_forward(x, params_f32, tb=8, tn=128)
    jax.block_until_ready((x_hat_a, c_a))
    assert x_hat_a.shape == (B, D) and c_a.shape == (B, N)
    assert jnp.allclose(x_hat_a, x_hat_ref, atol=1e-3, rtol=1e-3)
    assert jnp.allclose(c_a, c_ref, atol=1e-3, rtol=1e-3)

    # --- 2) bf16 compute path (the performance default), auto tiles. ---------
    params_bf16 = sae_prepare_params(w_enc, b_enc, w_dec)   # bf16 weights
    x_hat_b, c_b = sae_forward(x, params_bf16)               # f32 outputs
    jax.block_until_ready((x_hat_b, c_b))
    assert x_hat_b.shape == (B, D) and c_b.shape == (B, N)
    assert jnp.allclose(x_hat_b, x_hat_ref, atol=1e-1, rtol=5e-2)
    assert jnp.allclose(c_b, c_ref, atol=5e-2, rtol=5e-2)

    # --- 3) bf16 outputs (scratch-accumulator kernel), tn=128 so the n axis
    #        is actually reduced across grid steps. ---------------------------
    x_hat_c, c_c = sae_forward(x, params_bf16, out_dtype=jnp.bfloat16,
                               c_dtype=jnp.bfloat16, tn=128)
    jax.block_until_ready((x_hat_c, c_c))
    assert x_hat_c.dtype == jnp.bfloat16 and c_c.dtype == jnp.bfloat16
    assert jnp.allclose(x_hat_c.astype(jnp.float32), x_hat_ref,
                        atol=1.5e-1, rtol=1e-1)
    assert jnp.allclose(c_c.astype(jnp.float32), c_ref, atol=1.5e-1, rtol=1e-1)

    print("KERNEL_OK")
</pallas_src>

<mosaic_0001>
module attributes {stable_mosaic.version = 11 : i64} {
  func.func @_sae_kernel_acc_into_out(%arg0: i32, %arg1: i32, %arg2: memref<8x256xf32, #tpu.memory_space<vmem>>, %arg3: memref<256x128xf32, #tpu.memory_space<vmem>>, %arg4: memref<1x128xf32, #tpu.memory_space<vmem>>, %arg5: memref<128x256xf32, #tpu.memory_space<vmem>>, %arg6: memref<8x256xf32, #tpu.memory_space<vmem>>, %arg7: memref<8x128xf32, #tpu.memory_space<vmem>>) attributes {dimension_semantics = [#tpu.dimension_semantics<parallel>, #tpu.dimension_semantics<arbitrary>], iteration_bounds = array<i64: 2, 4>, scalar_prefetch = 0 : i64, scratch_operands = 0 : i64, tpu.core_type = #tpu.core_type<tc>, window_params = [{transform_indices = @transform_0, window_bounds = array<i64: 8, 256>}, {transform_indices = @transform_1, window_bounds = array<i64: 256, 128>}, {transform_indices = @transform_2, window_bounds = array<i64: 1, 128>}, {transform_indices = @transform_3, window_bounds = array<i64: 128, 256>}, {transform_indices = @transform_4, window_bounds = array<i64: 8, 256>}, {transform_indices = @transform_5, window_bounds = array<i64: 8, 128>}]} {
    %c0_i32 = arith.constant 0 : i32
    %0 = arith.cmpi eq, %arg1, %c0_i32 : i32
    %1 = arith.extui %0 : i1 to i32
    %c0_i32_0 = arith.constant 0 : i32
    %2 = arith.cmpi ne, %1, %c0_i32_0 : i32
    scf.if %2 {
      %cst_16 = arith.constant 0.000000e+00 : f32
      %17 = vector.broadcast %cst_16 : f32 to vector<8x256xf32>
      %c0_17 = arith.constant 0 : index
      %c0_18 = arith.constant 0 : index
      %18 = vector.load %arg6[%c0_17, %c0_18] : memref<8x256xf32, #tpu.memory_space<vmem>>, vector<8x256xf32>
      tpu.vector_store %arg6[%c0_17, %c0_18], %17 {strides = array<i32>} : memref<8x256xf32, #tpu.memory_space<vmem>>, vector<8x256xf32>,
    } else {
    }
    %c0 = arith.constant 0 : index
    %c0_1 = arith.constant 0 : index
    %3 = vector.load %arg2[%c0, %c0_1] : memref<8x256xf32, #tpu.memory_space<vmem>>, vector<8x256xf32>
    %c0_2 = arith.constant 0 : index
    %c0_3 = arith.constant 0 : index
    %4 = vector.load %arg3[%c0_2, %c0_3] : memref<256x128xf32, #tpu.memory_space<vmem>>, vector<256x128xf32>
    %cst = arith.constant dense<0.000000e+00> : vector<8x128xf32>
    %5 = tpu.matmul %3, %4, %cst {dimension_numbers = #tpu.dot_dimension_numbers<[1], [0], [0], [1], [0, 0, 1, 1], [], []>} : vector<8x256xf32>, vector<256x128xf32>, vector<8x128xf32> -> vector<8x128xf32>
    %c0_4 = arith.constant 0 : index
    %c0_5 = arith.constant 0 : index
    %6 = vector.load %arg4[%c0_4, %c0_5] : memref<1x128xf32, #tpu.memory_space<vmem>>, vector<1x128xf32>
    %7 = vector.broadcast %6 : vector<1x128xf32> to vector<8x128xf32>
    %8 = arith.addf %5, %7 : vector<8x128xf32>
    %cst_6 = arith.constant 0.000000e+00 : f32
    %9 = vector.broadcast %cst_6 : f32 to vector<8x128xf32>
    %10 = arith.maximumf %8, %9 : vector<8x128xf32>
    %c0_7 = arith.constant 0 : index
    %c0_8 = arith.constant 0 : index
    %11 = vector.load %arg7[%c0_7, %c0_8] : memref<8x128xf32, #tpu.memory_space<vmem>>, vector<8x128xf32>
    tpu.vector_store %arg7[%c0_7, %c0_8], %10 {strides = array<i32>} : memref<8x128xf32, #tpu.memory_space<vmem>>, vector<8x128xf32>,
    %c0_9 = arith.constant 0 : index
    %c0_10 = arith.constant 0 : index
    %12 = vector.load %arg6[%c0_9, %c0_10] : memref<8x256xf32, #tpu.memory_space<vmem>>, vector<8x256xf32>
    %c0_11 = arith.constant 0 : index
    %c0_12 = arith.constant 0 : index
    %13 = vector.load %arg5[%c0_11, %c0_12] : memref<128x256xf32, #tpu.memory_space<vmem>>, vector<128x256xf32>
    %cst_13 = arith.constant dense<0.000000e+00> : vector<8x256xf32>
    %14 = tpu.matmul %10, %13, %cst_13 {dimension_numbers = #tpu.dot_dimension_numbers<[1], [0], [0], [1], [0, 0, 1, 1], [], []>} : vector<8x128xf32>, vector<128x256xf32>, vector<8x256xf32> -> vector<8x256xf32>
    %15 = arith.addf %12, %14 : vector<8x256xf32>
    %c0_14 = arith.constant 0 : index
    %c0_15 = arith.constant 0 : index
    %16 = vector.load %arg6[%c0_14, %c0_15] : memref<8x256xf32, #tpu.memory_space<vmem>>, vector<8x256xf32>
    tpu.vector_store %arg6[%c0_14, %c0_15], %15 {strides = array<i32>} : memref<8x256xf32, #tpu.memory_space<vmem>>, vector<8x256xf32>,
    return
  }
  func.func @transform_0(%arg0: i32, %arg1: i32) -> (i32, i32) {
    %c0_i32 = arith.constant 0 : i32
    %c0_i32_0 = arith.constant 0 : i32
    return %arg0, %c0_i32 : i32, i32
  }
  func.func @transform_1(%arg0: i32, %arg1: i32) -> (i32, i32) {
    %c0_i32 = arith.constant 0 : i32
    %c0_i32_0 = arith.constant 0 : i32
    return %c0_i32, %arg1 : i32, i32
  }
  func.func @transform_2(%arg0: i32, %arg1: i32) -> (i32, i32) {
    %c0_i32 = arith.constant 0 : i32
    %c0_i32_0 = arith.constant 0 : i32
    return %c0_i32, %arg1 : i32, i32
  }
  func.func @transform_3(%arg0: i32, %arg1: i32) -> (i32, i32) {
    %c0_i32 = arith.constant 0 : i32
    %c0_i32_0 = arith.constant 0 : i32
    return %arg1, %c0_i32 : i32, i32
  }
  func.func @transform_4(%arg0: i32, %arg1: i32) -> (i32, i32) {
    %c0_i32 = arith.constant 0 : i32
    %c0_i32_0 = arith.constant 0 : i32
    return %arg0, %c0_i32 : i32, i32
  }
  func.func @transform_5(%arg0: i32, %arg1: i32) -> (i32, i32) {
    %c0_i32 = arith.constant 0 : i32
    return %arg0, %arg1 : i32, i32
  }
}

</mosaic_0001>

<llo_original>
// kernel: tpu_custom_call.1
$region0: #{tpu_custom_call.1}
  #allocation0 [shape = 'u32[]', space=smem, size = 0x4, offset = 0x4, fixed_abs, tag = 'smem constant byte address 0x4 - core index']
  #allocation1 [shape = 'u32[144,128]{1,0:T(1,128)}', space=vmem, size = 0x12000, scoped, tag = 'internal scratch']
  %s0 = inlined_call_operand.hbm [shape: f32[16,256], index: 0, kind: input, shape index: {}]
  %s1 = inlined_call_operand.hbm [shape: f32[256,512], index: 1, kind: input, shape index: {}]
  %s2 = inlined_call_operand.hbm [shape: f32[1,512], index: 2, kind: input, shape index: {}]
  %s3 = inlined_call_operand.hbm [shape: f32[512,256], index: 3, kind: input, shape index: {}]
  %s4 = inlined_call_operand.hbm [shape: f32[16,256], index: 4, kind: output, shape index: {0}]
  %s5 = inlined_call_operand.hbm [shape: f32[16,512], index: 5, kind: output, shape index: {1}]
  %6 = xla_tuple %s4, %s5
  %s7 = sld [smem:[#allocation0]]
  $region77: #{tpu_custom_call.1} parent=0
    _
  %s9 = ssub.s32 1, %s7
  %s10 = scalar_select 0, %s9, %s7
  $region1: #{tpu_custom_call.1} parent=0
    #allocation2 [shape = 'u8[16384]{0}', space=vmem, size = 0x4000, scoped, tag = 'input window, operand 0']
    #allocation3 [shape = 's32[2]{0}', space=sflag, size = 0x8, scoped, tag = 'scoped memory for tpu_custom_call.1']
    #allocation4 [shape = 's32[2]{0}', space=sflag, size = 0x8, scoped, tag = 'scoped memory for tpu_custom_call.1']
    #allocation5 [shape = 'u8[262144]{0}', space=vmem, size = 0x40000, scoped, tag = 'input window, operand 1']
    #allocation6 [shape = 's32[2]{0}', space=sflag, size = 0x8, scoped, tag = 'scoped memory for tpu_custom_call.1']
    #allocation7 [shape = 'u8[1024]{0}', space=vmem, size = 0x400, scoped, tag = 'input window, operand 2']
    #allocation8 [shape = 'u8[262144]{0}', space=vmem, size = 0x40000, scoped, tag = 'input window, operand 3']
    #allocation9 [shape = 's32[2]{0}', space=sflag, size = 0x8, scoped, tag = 'scoped memory for tpu_custom_call.1']
    #allocation10 [shape = 'u8[16384]{0}', space=vmem, size = 0x4000, scoped, tag = 'output window, operand 0']
    #allocation11 [shape = 'u8[8192]{0}', space=vmem, size = 0x2000, scoped, tag = 'output window, operand 1']
    #allocation12 [shape = 's32[2]{0}', space=sflag, size = 0x8, scoped, tag = 'scoped memory for tpu_custom_call.1']
    %11 = vsyncpa [#allocation3], 0
    %s12 = scalar_lea.sflag [#allocation3], 1
    %13 = vsyncpa %s12, 0
    %14 = vsyncpa [#allocation6], 0
    %s15 = scalar_lea.sflag [#allocation6], 1
    %16 = vsyncpa %s15, 0
    %17 = vsyncpa [#allocation9], 0
    %s18 = scalar_lea.sflag [#allocation9], 1
    %19 = vsyncpa %s18, 0
    %20 = vsyncpa [#allocation4], 0
    %s21 = scalar_lea.sflag [#allocation4], 1
    %22 = vsyncpa %s21, 0
    %23 = vsyncpa [#allocation12], 0
    %s24 = scalar_lea.sflag [#allocation12], 1
    %25 = vsyncpa %s24, 0
    loop: start=0, step=1, limit=10
    $region2: #{tpu_custom_call.1} parent=1 // loop_pre_header
      _
    $region3: #{tpu_custom_call.1} parent=1 // loop_header
      %s27 = sphi 0, %s31
      %p28 = scmp.ge.s32.totalorder %s27, 10
      %s34 = sphi 0, %s46
      %s35 = sphi 0, %s42
      %s36 = sphi 0, %s34
      %s37 = sphi 0, %s35
      %s38 = sphi 0, %s36
      %s39 = sphi 0, %s37
      %s49 = sphi 0, %s51
      %s52 = sphi 0, %s49
      %s53 = sphi 0, %s52
      %s69 = sphi 0, %s53
      %s75 = sphi 0, %s77
      %s78 = sphi 0, %s75
      %s79 = sphi 0, %s78
      %s95 = sphi 0, %s79
      %s101 = sphi 0, %s103
      %s104 = sphi 0, %s101
      %s105 = sphi 0, %s104
      %s121 = sphi 0, %s105
      %s127 = sphi 0, %s129
      %s130 = sphi 0, %s127
      %s131 = sphi 0, %s130
      %s147 = sphi 0, %s131
      %s153 = sphi 0, %s155
      %s156 = sphi 0, %s153
      %s157 = sphi 0, %s156
      %s173 = sphi 0, %s157
      %s181 = sphi 0, %s183
      %s184 = sphi 0, %s181
      %s185 = sphi 0, %s184
      %s201 = sphi 0, %s185
    $region4: #{tpu_custom_call.1} parent=1 // loop_header_branch
      %30 = sbr.rel (%p28) target = $region8
    $region5: #{tpu_custom_call.1} parent=1 // loop_body
      %s32 = ssub.s32 %s27, 1
      %s33 = ssub.s32 %s27, 2
      %s40 = sadd.s32 1, %s35
      %p41 = scmp.ge.s32.totalorder %s40, 4
      %s42 = scalar_select %p41, 0, %s40
      %s43 = sadd.s32 1, %s34
      %s44 = scalar_select %p41, %s43, %s34
      %p45 = scmp.ge.s32.totalorder %s44, 2
      %s46 = scalar_select %p45, 0, %s44
      %s47 = ssub.s32 %s34, %s46
      %p48 = scmp.eq.s32.totalorder %s47, 0
      %s50 = sadd.s32 %s49, 1
      %s51 = scalar_select %p48, %s49, %s50
      %p54 = pneg %p48
      %p55 = scmp.eq.s32.totalorder %s27, 7
      %p56 = por %p54, %p55
      %p57 = scmp.ne.s32.totalorder %s49, %s52
      %p58 = scmp.eq.s32.totalorder %s27, 0
      %p59 = por %p57, %p58
      %p60 = scmp.ne.s32.totalorder %s49, %s52
      %p61 = scmp.eq.s32.totalorder %s32, 7
      %p62 = por %p60, %p61
      %p63 = scmp.ne.s32.totalorder %s52, %s53
      %p64 = scmp.eq.s32.totalorder %s32, 0
      %p65 = por %p63, %p64
      %p66 = scmp.ne.s32.totalorder %s52, %s53
      %p67 = scmp.eq.s32.totalorder %s33, 7
      %p68 = por %p66, %p67
      %p70 = scmp.ne.s32.totalorder %s53, %s69
      %p71 = scmp.eq.s32.totalorder %s33, 0
      %p72 = por %p70, %p71
      %s73 = ssub.s32 %s35, %s42
      %p74 = scmp.eq.s32.totalorder %s73, 0
      %s76 = sadd.s32 %s75, 1
      %s77 = scalar_select %p74, %s75, %s76
      %p80 = pneg %p74
      %p81 = scmp.eq.s32.totalorder %s27, 7
      %p82 = por %p80, %p81
      %p83 = scmp.ne.s32.totalorder %s75, %s78
      %p84 = scmp.eq.s32.totalorder %s27, 0
      %p85 = por %p83, %p84
      %p86 = scmp.ne.s32.totalorder %s75, %s78
      %p87 = scmp.eq.s32.totalorder %s32, 7
      %p88 = por %p86, %p87
      %p89 = scmp.ne.s32.totalorder %s78, %s79
      %p90 = scmp.eq.s32.totalorder %s32, 0
      %p91 = por %p89, %p90
      %p92 = scmp.ne.s32.totalorder %s78, %s79
      %p93 = scmp.eq.s32.totalorder %s33, 7
      %p94 = por %p92, %p93
      %p96 = scmp.ne.s32.totalorder %s79, %s95
      %p97 = scmp.eq.s32.totalorder %s33, 0
      %p98 = por %p96, %p97
      %s99 = ssub.s32 %s35, %s42
      %p100 = scmp.eq.s32.totalorder %s99, 0
      %s102 = sadd.s32 %s101, 1
      %s103 = scalar_select %p100, %s101, %s102
      %p106 = pneg %p100
      %p107 = scmp.eq.s32.totalorder %s27, 7
      %p108 = por %p106, %p107
      %p109 = scmp.ne.s32.totalorder %s101, %s104
      %p110 = scmp.eq.s32.totalorder %s27, 0
      %p111 = por %p109, %p110
      %p112 = scmp.ne.s32.totalorder %s101, %s104
      %p113 = scmp.eq.s32.totalorder %s32, 7
      %p114 = por %p112, %p113
      %p115 = scmp.ne.s32.totalorder %s104, %s105
      %p116 = scmp.eq.s32.totalorder %s32, 0
      %p117 = por %p115, %p116
      %p118 = scmp.ne.s32.totalorder %s104, %s105
      %p119 = scmp.eq.s32.totalorder %s33, 7
      %p120 = por %p118, %p119
      %p122 = scmp.ne.s32.totalorder %s105, %s121
      %p123 = scmp.eq.s32.totalorder %s33, 0
      %p124 = por %p122, %p123
      %s125 = ssub.s32 %s35, %s42
      %p126 = scmp.eq.s32.totalorder %s125, 0
      %s128 = sadd.s32 %s127, 1
      %s129 = scalar_select %p126, %s127, %s128
      %p132 = pneg %p126
      %p133 = scmp.eq.s32.totalorder %s27, 7
      %p134 = por %p132, %p133
      %p135 = scmp.ne.s32.totalorder %s127, %s130
      %p136 = scmp.eq.s32.totalorder %s27, 0
      %p137 = por %p135, %p136
      %p138 = scmp.ne.s32.totalorder %s127, %s130
      %p139 = scmp.eq.s32.totalorder %s32, 7
      %p140 = por %p138, %p139
      %p141 = scmp.ne.s32.totalorder %s130, %s131
      %p142 = scmp.eq.s32.totalorder %s32, 0
      %p143 = por %p141, %p142
      %p144 = scmp.ne.s32.totalorder %s130, %s131
      %p145 = scmp.eq.s32.totalorder %s33, 7
      %p146 = por %p144, %p145
      %p148 = scmp.ne.s32.totalorder %s131, %s147
      %p149 = scmp.eq.s32.totalorder %s33, 0
      %p150 = por %p148, %p149
      %s151 = ssub.s32 %s34, %s46
      %p152 = scmp.eq.s32.totalorder %s151, 0
      %s154 = sadd.s32 %s153, 1
      %s155 = scalar_select %p152, %s153, %s154
      %p158 = pneg %p152
      %p159 = scmp.eq.s32.totalorder %s27, 7
      %p160 = por %p158, %p159
      %p161 = scmp.ne.s32.totalorder %s153, %s156
      %p162 = scmp.eq.s32.totalorder %s27, 0
      %p163 = por %p161, %p162
      %p164 = scmp.ne.s32.totalorder %s153, %s156
      %p165 = scmp.eq.s32.totalorder %s32, 7
      %p166 = por %p164, %p165
      %p167 = scmp.ne.s32.totalorder %s156, %s157
      %p168 = scmp.eq.s32.totalorder %s32, 0
      %p169 = por %p167, %p168
      %p170 = scmp.ne.s32.totalorder %s156, %s157
      %p171 = scmp.eq.s32.totalorder %s33, 7
      %p172 = por %p170, %p171
      %p174 = scmp.ne.s32.totalorder %s157, %s173
      %p175 = scmp.eq.s32.totalorder %s33, 0
      %p176 = por %p174, %p175
      %s177 = ssub.s32 %s34, %s46
      %s178 = ssub.s32 %s35, %s42
      %s179 = sor.u32 %s177, %s178
      %p180 = scmp.eq.s32.totalorder %s179, 0
      %s182 = sadd.s32 %s181, 1
      %s183 = scalar_select %p180, %s181, %s182
      %p186 = pneg %p180
      %p187 = scmp.eq.s32.totalorder %s27, 7
      %p188 = por %p186, %p187
      %p189 = scmp.ne.s32.totalorder %s181, %s184
      %p190 = scmp.eq.s32.totalorder %s27, 0
      %p191 = por %p189, %p190
      %p192 = scmp.ne.s32.totalorder %s181, %s184
      %p193 = scmp.eq.s32.totalorder %s32, 7
      %p194 = por %p192, %p193
      %p195 = scmp.ne.s32.totalorder %s184, %s185
      %p196 = scmp.eq.s32.totalorder %s32, 0
      %p197 = por %p195, %p196
      %p198 = scmp.ne.s32.totalorder %s184, %s185
      %p199 = scmp.eq.s32.totalorder %s33, 7
      %p200 = por %p198, %p199
      %p202 = scmp.ne.s32.totalorder %s185, %s201
      %p203 = scmp.eq.s32.totalorder %s33, 0
      %p204 = por %p202, %p203
      %p205 = scmp.le.s32.totalorder 1, %s27
      %p206 = scmp.lt.s32.totalorder %s27, 9
      %p207 = pnand %p205, %p206
      %p208 = pneg %p207
      // Predicated region
      $region9: #{tpu_custom_call.1} parent=5 // pred_check
        _
      $region10: #{tpu_custom_call.1} parent=5 // pred_check_branch
        %210 = sbr.rel (%p207) target = $region12
      $region11: #{tpu_custom_call.1} parent=5 // pred_region
        %s211 = ssub.s32 %s27, 1
      $region12: #{tpu_custom_call.1} parent=5 // pred_fallthru
        _
      %p212 = scmp.lt.s32.totalorder %s27, 8
      // Predicated region
      $region13: #{tpu_custom_call.1} parent=5 // pred_check
        %p213 = pneg %p212
      $region14: #{tpu_custom_call.1} parent=5 // pred_check_branch
        %215 = sbr.rel (%p213) target = $region16
      $region15: #{tpu_custom_call.1} parent=5 // pred_region
        // Predicated region
        $region17: #{tpu_custom_call.1} parent=15 // pred_check
          %p216 = pneg %p59
        $region18: #{tpu_custom_call.1} parent=15 // pred_check_branch
          %218 = sbr.rel (%p216) target = $region20
        $region19: #{tpu_custom_call.1} parent=15 // pred_region
          %s219 = sand.u32 %s49, 1
          %s220 = scalar_lea.sflag [#allocation3], %s219
          %s221 = sand.u32 %s49, 1
          %s222 = smul.addr %s221, 16
          %s223 = scalar_lea.vmem [#allocation2], %s222
          %s225 = ssub.s32 256, 256
          %226 = vsyncadd %s220, %s225
          %s227 = smul.addr %s34, 2
          %s228 = smul.addr %s227, 128
          %s229 = scalar_lea.hbm %s0, %s228
          %s231 = sshll.u32 %s223, 4
          %s232 = int_to_ptr.vmem [resolvable:$true] %s231
          %234 = dma.hbm_to_vmem [thread:$0]  %s229, 256, %s232, %s220
        $region20: #{tpu_custom_call.1} parent=15 // pred_fallthru
          _
        // Predicated region
        $region21: #{tpu_custom_call.1} parent=15 // pred_check
          %p235 = pneg %p85
        $region22: #{tpu_custom_call.1} parent=15 // pred_check_branch
          %237 = sbr.rel (%p235) target = $region24
        $region23: #{tpu_custom_call.1} parent=15 // pred_region
          %s238 = sand.u32 %s27, 1
          %s239 = scalar_lea.sflag [#allocation6], %s238
          %s240 = sand.u32 %s75, 1
          %s241 = smul.addr %s240, 256
          %s242 = scalar_lea.vmem [#allocation5], %s241
          %s244 = ssub.s32 4096, 4096
          %245 = vsyncadd %s239, %s244
          %s246 = smul.addr %s35, 128
          %s247 = scalar_lea.hbm %s1, %s246
          %s248 = sshll.u32 %s242, 4
          %s249 = int_to_ptr.vmem [resolvable:$true] %s248
          %254 = dma.hbm_to_vmem [thread:$0]  %s247, 4096, %s249, %s239, 512, 128, 8
        $region24: #{tpu_custom_call.1} parent=15 // pred_fallthru
          _
        // Predicated region
        $region25: #{tpu_custom_call.1} parent=15 // pred_check
          %p255 = pneg %p111
        $region26: #{tpu_custom_call.1} parent=15 // pred_check_branch
          %257 = sbr.rel (%p255) target = $region28
        $region27: #{tpu_custom_call.1} parent=15 // pred_region
          %s258 = sand.u32 %s27, 1
          %s259 = scalar_lea.sflag [#allocation6], %s258
          %s260 = sand.u32 %s101, 1
          %s261 = scalar_lea.vmem [#allocation7], %s260
          %s263 = ssub.s32 16, 16
          %264 = vsyncadd %s259, %s263
          %s265 = smul.addr %s35, 16
          %s266 = scalar_lea.hbm %s2, %s265
          %s268 = sshll.u32 %s261, 4
          %s269 = int_to_ptr.vmem [resolvable:$true] %s268
          %271 = dma.hbm_to_vmem [thread:$0]  %s266, 16, %s269, %s259
        $region28: #{tpu_custom_call.1} parent=15 // pred_fallthru
          _
        // Predicated region
        $region29: #{tpu_custom_call.1} parent=15 // pred_check
          %p272 = pneg %p137
        $region30: #{tpu_custom_call.1} parent=15 // pred_check_branch
          %274 = sbr.rel (%p272) target = $region32
        $region31: #{tpu_custom_call.1} parent=15 // pred_region
          %s275 = sand.u32 %s127, 1
          %s276 = scalar_lea.sflag [#allocation9], %s275
          %s277 = sand.u32 %s127, 1
          %s278 = smul.addr %s277, 256
          %s279 = scalar_lea.vmem [#allocation8], %s278
          %s280 = smul.u32 16, %s35
          %s282 = ssub.s32 4096, 4096
          %283 = vsyncadd %s276, %s282
          %s284 = smul.addr %s280, 2
          %s285 = smul.addr %s284, 128
          %s286 = scalar_lea.hbm %s3, %s285
          %s287 = sshll.u32 %s279, 4
          %s288 = int_to_ptr.vmem [resolvable:$true] %s287
          %293 = dma.hbm_to_vmem [thread:$0]  %s286, 4096, %s288, %s276, 256, 256, 16
        $region32: #{tpu_custom_call.1} parent=15 // pred_fallthru
          _
      $region16: #{tpu_custom_call.1} parent=5 // pred_fallthru
        _
      %p294 = scmp.le.s32.totalorder 1, %s27
      %p295 = scmp.lt.s32.totalorder %s27, 9
      %p296 = pnand %p294, %p295
      %p297 = pneg %p296
      // Predicated region
      $region33: #{tpu_custom_call.1} parent=5 // pred_check
        _
      $region34: #{tpu_custom_call.1} parent=5 // pred_check_branch
        %299 = sbr.rel (%p296) target = $region36
      $region35: #{tpu_custom_call.1} parent=5 // pred_region
        %s300 = ssub.s32 %s27, 1
        %s301 = sand.u32 %s52, 1
        %s302 = scalar_lea.sflag [#allocation3], %s301
        %s303 = sand.u32 %s52, 1
        %s304 = smul.addr %s303, 16
        %s305 = scalar_lea.vmem [#allocation2], %s304
        // Predicated region
        $region37: #{tpu_custom_call.1} parent=35 // pred_check
          %p306 = pneg %p65
        $region38: #{tpu_custom_call.1} parent=35 // pred_check_branch
          %308 = sbr.rel (%p306) target = $region40
        $region39: #{tpu_custom_call.1} parent=35 // pred_region
          %309 = dma.done %s302, 256
        $region40: #{tpu_custom_call.1} parent=35 // pred_fallthru
          _
        %s310 = sand.u32 %s32, 1
        %s311 = scalar_lea.sflag [#allocation6], %s310
        %s312 = sand.u32 %s78, 1
        %s313 = smul.addr %s312, 256
        %s314 = scalar_lea.vmem [#allocation5], %s313
        // Predicated region
        $region41: #{tpu_custom_call.1} parent=35 // pred_check
          %p315 = pneg %p91
        $region42: #{tpu_custom_call.1} parent=35 // pred_check_branch
          %317 = sbr.rel (%p315) target = $region44
        $region43: #{tpu_custom_call.1} parent=35 // pred_region
          %318 = dma.done %s311, 4096
        $region44: #{tpu_custom_call.1} parent=35 // pred_fallthru
          _
        %s319 = sand.u32 %s32, 1
        %s320 = scalar_lea.sflag [#allocation6], %s319
        %s321 = sand.u32 %s104, 1
        %s322 = scalar_lea.vmem [#allocation7], %s321
        // Predicated region
        $region45: #{tpu_custom_call.1} parent=35 // pred_check
          %p323 = pneg %p117
        $region46: #{tpu_custom_call.1} parent=35 // pred_check_branch
          %325 = sbr.rel (%p323) target = $region48
        $region47: #{tpu_custom_call.1} parent=35 // pred_region
          %326 = dma.done %s320, 16
        $region48: #{tpu_custom_call.1} parent=35 // pred_fallthru
          _
        %s327 = sand.u32 %s130, 1
        %s328 = scalar_lea.sflag [#allocation9], %s327
        %s329 = sand.u32 %s130, 1
        %s330 = smul.addr %s329, 256
        %s331 = scalar_lea.vmem [#allocation8], %s330
        // Predicated region
        $region49: #{tpu_custom_call.1} parent=35 // pred_check
          %p332 = pneg %p143
        $region50: #{tpu_custom_call.1} parent=35 // pred_check_branch
          %334 = sbr.rel (%p332) target = $region52
        $region51: #{tpu_custom_call.1} parent=35 // pred_region
          %335 = dma.done %s328, 4096
        $region52: #{tpu_custom_call.1} parent=35 // pred_fallthru
          _
        %s336 = sand.u32 %s52, 1
        %s337 = scalar_lea.sflag [#allocation3], %s336
        %s338 = sand.u32 %s52, 1
        %s339 = smul.addr %s338, 16
        %s340 = scalar_lea.vmem [#allocation2], %s339
        %p341 = pneg %p65
        %p342 = pneg %p62
        %s343 = sand.u32 %s32, 1
        %s344 = scalar_lea.sflag [#allocation6], %s343
        %s345 = sand.u32 %s78, 1
        %s346 = smul.addr %s345, 256
        %s347 = scalar_lea.vmem [#allocation5], %s346
        %p348 = pneg %p91
        %p349 = pneg %p88
        %s350 = sand.u32 %s32, 1
        %s351 = scalar_lea.sflag [#allocation6], %s350
        %s352 = sand.u32 %s104, 1
        %s353 = scalar_lea.vmem [#allocation7], %s352
        %p354 = pneg %p117
        %p355 = pneg %p114
        %s356 = sand.u32 %s130, 1
        %s357 = scalar_lea.sflag [#allocation9], %s356
        %s358 = sand.u32 %s130, 1
        %s359 = smul.addr %s358, 256
        %s360 = scalar_lea.vmem [#allocation8], %s359
        %p361 = pneg %p143
        %p362 = pneg %p140
        %p363 = pneg %p169
        %p364 = pneg %p166
        %s365 = sand.u32 %s156, 1
        %s366 = scalar_lea.sflag [#allocation4], %s365
        %s367 = sand.u32 %s156, 1
        %s368 = smul.addr %s367, 16
        %s369 = scalar_lea.vmem [#allocation10], %s368
        %p370 = pneg %p197
        %p371 = pneg %p194
        %s372 = sand.u32 %s184, 1
        %s373 = scalar_lea.sflag [#allocation12], %s372
        %s374 = sand.u32 %s184, 1
        %s375 = smul.addr %s374, 8
        %s376 = scalar_lea.vmem [#allocation11], %s375
        %s377 = smul.u32 16, %s37
        %p378 = scmp.eq.s32.totalorder %s37, 0
        // Predicated region
        $region53: #{tpu_custom_call.1} parent=35 // pred_check
          %p379 = pneg %p378
        $region54: #{tpu_custom_call.1} parent=35 // pred_check_branch
          %381 = sbr.rel (%p379) target = $region56
        $region55: #{tpu_custom_call.1} parent=35 // pred_region
          %382 = vst [vmem:[%s369] sm:$0xff] 0.0
          %383 = vst [vmem:[%s369 + $0x8] sm:$0xff] 0.0
        $region56: #{tpu_custom_call.1} parent=35 // pred_fallthru
          _
        %v384 = vld [vmem:[%s305] sm:$0xff]
        %v385 = vld [vmem:[%s305 + $0x8] sm:$0xff]
        %v386 = vld [vmem:[%s314] sm:$0xff]
        %v387 = vld [vmem:[%s314 + $0x8] sm:$0xff]
        %v388 = vld [vmem:[%s314 + $0x10] sm:$0xff]
        %v389 = vld [vmem:[%s314 + $0x18] sm:$0xff]
        %v390 = vld [vmem:[%s314 + $0x20] sm:$0xff]
        %v391 = vld [vmem:[%s314 + $0x28] sm:$0xff]
        %v392 = vld [vmem:[%s314 + $0x30] sm:$0xff]
        %v393 = vld [vmem:[%s314 + $0x38] sm:$0xff]
        %v394 = vld [vmem:[%s314 + $0x40] sm:$0xff]
        %v395 = vld [vmem:[%s314 + $0x48] sm:$0xff]
        %v396 = vld [vmem:[%s314 + $0x50] sm:$0xff]
        %v397 = vld [vmem:[%s314 + $0x58] sm:$0xff]
        %v398 = vld [vmem:[%s314 + $0x60] sm:$0xff]
        %v399 = vld [vmem:[%s314 + $0x68] sm:$0xff]
        %v400 = vld [vmem:[%s314 + $0x70] sm:$0xff]
        %v401 = vld [vmem:[%s314 + $0x78] sm:$0xff]
        %v402 = vld [vmem:[%s314 + $0x80] sm:$0xff]
        %v403 = vld [vmem:[%s314 + $0x88] sm:$0xff]
        %v404 = vld [vmem:[%s314 + $0x90] sm:$0xff]
        %v405 = vld [vmem:[%s314 + $0x98] sm:$0xff]
        %v406 = vld [vmem:[%s314 + $0xa0] sm:$0xff]
        %v407 = vld [vmem:[%s314 + $0xa8] sm:$0xff]
        %v408 = vld [vmem:[%s314 + $0xb0] sm:$0xff]
        %v409 = vld [vmem:[%s314 + $0xb8] sm:$0xff]
        %v410 = vld [vmem:[%s314 + $0xc0] sm:$0xff]
        %v411 = vld [vmem:[%s314 + $0xc8] sm:$0xff]
        %v412 = vld [vmem:[%s314 + $0xd0] sm:$0xff]
        %v413 = vld [vmem:[%s314 + $0xd8] sm:$0xff]
        %v414 = vld [vmem:[%s314 + $0xe0] sm:$0xff]
        %v415 = vld [vmem:[%s314 + $0xe8] sm:$0xff]
        %v416 = vld [vmem:[%s314 + $0xf0] sm:$0xff]
        %v417 = vld [vmem:[%s314 + $0xf8] sm:$0xff]
        %v418 = vld [vmem:[%s322] sm:$0x1]
        %v420 = vlaneseq
        %v421 = vshrl.u32 %v420, 7
        %v422 = vsub.s32 0, %v421
        %v423 = vrot.slane %v418, %v422
        %425 = vmatprep.subr.mxu0 0.0
        %426 = vmatpush1.msra.mxu0 %v401
        %427 = vmatprep.subr.mxu0 0.0
        %428 = vmatpush1.msra.mxu0 %v400
        %429 = vmatprep.subr.mxu0 0.0
        %430 = vmatpush1.msra.mxu0 %v399
        %431 = vmatprep.subr.mxu0 0.0
        %432 = vmatpush1.msra.mxu0 %v398
        %433 = vmatprep.subr.mxu0 0.0
        %434 = vmatpush1.msra.mxu0 %v397
        %435 = vmatprep.subr.mxu0 0.0
        %436 = vmatpush1.msra.mxu0 %v396
        %437 = vmatprep.subr.mxu0 0.0
        %438 = vmatpush1.msra.mxu0 %v395
        %439 = vmatprep.subr.mxu0 0.0
        %440 = vmatpush1.msra.mxu0 %v394
        %441 = vmatprep.subr.mxu0 0.0
        %442 = vmatpush1.msra.mxu0 %v393
        %443 = vmatprep.subr.mxu0 0.0
        %444 = vmatpush1.msra.mxu0 %v392
        %445 = vmatprep.subr.mxu0 0.0
        %446 = vmatpush1.msra.mxu0 %v391
        %447 = vmatprep.subr.mxu0 0.0
        %448 = vmatpush1.msra.mxu0 %v390
        %449 = vmatprep.subr.mxu0 0.0
        %450 = vmatpush1.msra.mxu0 %v389
        %451 = vmatprep.subr.mxu0 0.0
        %452 = vmatpush1.msra.mxu0 %v388
        %453 = vmatprep.subr.mxu0 0.0
        %454 = vmatpush1.msra.mxu0 %v387
        %455 = vmatprep.subr.mxu0 0.0
        %456 = vmatpush1.msra.mxu0 %v386
        %457 = vmatprep.subr.mxu0 0.0
        %458 = vmatpush2.msra.mxu0 %v417
        %459 = vmatprep.subr.mxu0 0.0
        %460 = vmatpush2.msra.mxu0 %v416
        %461 = vmatprep.subr.mxu0 0.0
        %462 = vmatpush2.msra.mxu0 %v415
        %463 = vmatprep.subr.mxu0 0.0
        %464 = vmatpush2.msra.mxu0 %v414
        %465 = vmatprep.subr.mxu0 0.0
        %466 = vmatpush2.msra.mxu0 %v413
        %467 = vmatprep.subr.mxu0 0.0
        %468 = vmatpush2.msra.mxu0 %v412
        %469 = vmatprep.subr.mxu0 0.0
        %470 = vmatpush2.msra.mxu0 %v411
        %471 = vmatprep.subr.mxu0 0.0
        %472 = vmatpush2.msra.mxu0 %v410
        %473 = vmatprep.subr.mxu0 0.0
        %474 = vmatpush2.msra.mxu0 %v409
        %475 = vmatprep.subr.mxu0 0.0
        %476 = vmatpush2.msra.mxu0 %v408
        %477 = vmatprep.subr.mxu0 0.0
        %478 = vmatpush2.msra.mxu0 %v407
        %479 = vmatprep.subr.mxu0 0.0
        %480 = vmatpush2.msra.mxu0 %v406
        %481 = vmatprep.subr.mxu0 0.0
        %482 = vmatpush2.msra.mxu0 %v405
        %483 = vmatprep.subr.mxu0 0.0
        %484 = vmatpush2.msra.mxu0 %v404
        %485 = vmatprep.subr.mxu0 0.0
        %486 = vmatpush2.msra.mxu0 %v403
        %487 = vmatprep.subr.mxu0 0.0
        %488 = vmatpush2.msra.mxu0 %v402
        %489 = vmatprep.mubr.f32.mxu0 %v385
        %490 = vmatmul.mubr.f32.gmra.mxu0 %v384
        %v491 = vpop.f32.mrf.mxu0
        %v492 = vadd.f32 %v423, %v491
        %v493 = vpop.f32.mrf.mxu0
        %494 = vdwg.mxu0
        %v495 = vmax.f32 %v492, 0.0
        %496 = vst [vmem:[%s376] sm:$0xff] %v495
        %v497 = vld [vmem:[%s369] sm:$0xff]
        %v498 = vld [vmem:[%s369 + $0x8] sm:$0xff]
        %v499 = vld [vmem:[%s331] sm:$0xff]
        %v500 = vld [vmem:[%s331 + $0x8] sm:$0xff]
        %v501 = vld [vmem:[%s331 + $0x10] sm:$0xff]
        %v502 = vld [vmem:[%s331 + $0x18] sm:$0xff]
        %v503 = vld [vmem:[%s331 + $0x20] sm:$0xff]
        %v504 = vld [vmem:[%s331 + $0x28] sm:$0xff]
        %v505 = vld [vmem:[%s331 + $0x30] sm:$0xff]
        %v506 = vld [vmem:[%s331 + $0x38] sm:$0xff]
        %v507 = vld [vmem:[%s331 + $0x40] sm:$0xff]
        %v508 = vld [vmem:[%s331 + $0x48] sm:$0xff]
        %v509 = vld [vmem:[%s331 + $0x50] sm:$0xff]
        %v510 = vld [vmem:[%s331 + $0x58] sm:$0xff]
        %v511 = vld [vmem:[%s331 + $0x60] sm:$0xff]
        %v512 = vld [vmem:[%s331 + $0x68] sm:$0xff]
        %v513 = vld [vmem:[%s331 + $0x70] sm:$0xff]
        %v514 = vld [vmem:[%s331 + $0x78] sm:$0xff]
        %v515 = vld [vmem:[%s331 + $0x80] sm:$0xff]
        %v516 = vld [vmem:[%s331 + $0x88] sm:$0xff]
        %v517 = vld [vmem:[%s331 + $0x90] sm:$0xff]
        %v518 = vld [vmem:[%s331 + $0x98] sm:$0xff]
        %v519 = vld [vmem:[%s331 + $0xa0] sm:$0xff]
        %v520 = vld [vmem:[%s331 + $0xa8] sm:$0xff]
        %v521 = vld [vmem:[%s331 + $0xb0] sm:$0xff]
        %v522 = vld [vmem:[%s331 + $0xb8] sm:$0xff]
        %v523 = vld [vmem:[%s331 + $0xc0] sm:$0xff]
        %v524 = vld [vmem:[%s331 + $0xc8] sm:$0xff]
        %v525 = vld [vmem:[%s331 + $0xd0] sm:$0xff]
        %v526 = vld [vmem:[%s331 + $0xd8] sm:$0xff]
        %v527 = vld [vmem:[%s331 + $0xe0] sm:$0xff]
        %v528 = vld [vmem:[%s331 + $0xe8] sm:$0xff]
        %v529 = vld [vmem:[%s331 + $0xf0] sm:$0xff]
        %v530 = vld [vmem:[%s331 + $0xf8] sm:$0xff]
        %531 = vmatprep.subr.mxu0 %v530
        %532 = vmatpush1.msra.mxu0 %v529
        %533 = vmatprep.subr.mxu0 %v528
        %534 = vmatpush1.msra.mxu0 %v527
        %535 = vmatprep.subr.mxu0 %v526
        %536 = vmatpush1.msra.mxu0 %v525
        %537 = vmatprep.subr.mxu0 %v524
        %538 = vmatpush1.msra.mxu0 %v523
        %539 = vmatprep.subr.mxu0 %v522
        %540 = vmatpush1.msra.mxu0 %v521
        %541 = vmatprep.subr.mxu0 %v520
        %542 = vmatpush1.msra.mxu0 %v519
        %543 = vmatprep.subr.mxu0 %v518
        %544 = vmatpush1.msra.mxu0 %v517
        %545 = vmatprep.subr.mxu0 %v516
        %546 = vmatpush1.msra.mxu0 %v515
        %547 = vmatprep.subr.mxu0 %v514
        %548 = vmatpush1.msra.mxu0 %v513
        %549 = vmatprep.subr.mxu0 %v512
        %550 = vmatpush1.msra.mxu0 %v511
        %551 = vmatprep.subr.mxu0 %v510
        %552 = vmatpush1.msra.mxu0 %v509
        %553 = vmatprep.subr.mxu0 %v508
        %554 = vmatpush1.msra.mxu0 %v507
        %555 = vmatprep.subr.mxu0 %v506
        %556 = vmatpush1.msra.mxu0 %v505
        %557 = vmatprep.subr.mxu0 %v504
        %558 = vmatpush1.msra.mxu0 %v503
        %559 = vmatprep.subr.mxu0 %v502
        %560 = vmatpush1.msra.mxu0 %v501
        %561 = vmatprep.subr.mxu0 %v500
        %562 = vmatpush1.msra.mxu0 %v499
        %563 = vmatprep.subr.mxu0 0.0
        %564 = vmatpush2.msra.mxu0 0.0
        %565 = vmatprep.subr.mxu0 0.0
        %566 = vmatpush2.msra.mxu0 0.0
        %567 = vmatprep.subr.mxu0 0.0
        %568 = vmatpush2.msra.mxu0 0.0
        %569 = vmatprep.subr.mxu0 0.0
        %570 = vmatpush2.msra.mxu0 0.0
        %571 = vmatprep.subr.mxu0 0.0
        %572 = vmatpush2.msra.mxu0 0.0
        %573 = vmatprep.subr.mxu0 0.0
        %574 = vmatpush2.msra.mxu0 0.0
        %575 = vmatprep.subr.mxu0 0.0
        %576 = vmatpush2.msra.mxu0 0.0
        %577 = vmatprep.subr.mxu0 0.0
        %578 = vmatpush2.msra.mxu0 0.0
        %579 = vmatprep.subr.mxu0 0.0
        %580 = vmatpush2.msra.mxu0 0.0
        %581 = vmatprep.subr.mxu0 0.0
        %582 = vmatpush2.msra.mxu0 0.0
        %583 = vmatprep.subr.mxu0 0.0
        %584 = vmatpush2.msra.mxu0 0.0
        %585 = vmatprep.subr.mxu0 0.0
        %586 = vmatpush2.msra.mxu0 0.0
        %587 = vmatprep.subr.mxu0 0.0
        %588 = vmatpush2.msra.mxu0 0.0
        %589 = vmatprep.subr.mxu0 0.0
        %590 = vmatpush2.msra.mxu0 0.0
        %591 = vmatprep.subr.mxu0 0.0
        %592 = vmatpush2.msra.mxu0 0.0
        %593 = vmatprep.subr.mxu0 0.0
        %594 = vmatpush2.msra.mxu0 0.0
        %595 = vmatprep.mubr.f32.mxu0 0.0
        %596 = vmatmul.mubr.f32.gmra.mxu0 %v495
        %v597 = vpop.f32.mrf.mxu0
        %v598 = vadd.f32 0.0, %v597
        %v599 = vpop.f32.mrf.mxu0
        %v600 = vadd.f32 0.0, %v599
        %601 = vdwg.mxu0
        %v602 = vadd.f32 %v497, %v598
        %v603 = vadd.f32 %v498, %v600
        %604 = vst [vmem:[%s369] sm:$0xff] %v602
        %605 = vst [vmem:[%s369 + $0x8] sm:$0xff] %v603
        %s606 = sand.u32 %s156, 1
        %s607 = scalar_lea.sflag [#allocation4], %s606
        %s608 = sand.u32 %s156, 1
        %s609 = smul.addr %s608, 16
        %s610 = scalar_lea.vmem [#allocation10], %s609
        %s611 = sand.u32 %s184, 1
        %s612 = scalar_lea.sflag [#allocation12], %s611
        %s613 = sand.u32 %s184, 1
        %s614 = smul.addr %s613, 8
        %s615 = scalar_lea.vmem [#allocation11], %s614
        // Predicated region
        $region57: #{tpu_custom_call.1} parent=35 // pred_check
          %p616 = pneg %p166
        $region58: #{tpu_custom_call.1} parent=35 // pred_check_branch
          %618 = sbr.rel (%p616) target = $region60
        $region59: #{tpu_custom_call.1} parent=35 // pred_region
          %s620 = ssub.s32 256, 256
          %621 = vsyncadd %s607, %s620
          %s622 = smul.addr %s36, 2
          %s623 = smul.addr %s622, 128
          %s624 = scalar_lea.hbm %s4, %s623
          %s626 = sshll.u32 %s610, 4
          %s627 = int_to_ptr.vmem [resolvable:$true] %s626
          %629 = dma.vmem_to_hbm [thread:$0]  %s627, 256, %s624, %s607
        $region60: #{tpu_custom_call.1} parent=35 // pred_fallthru
          _
        // Predicated region
        $region61: #{tpu_custom_call.1} parent=35 // pred_check
          %p630 = pneg %p194
        $region62: #{tpu_custom_call.1} parent=35 // pred_check_branch
          %632 = sbr.rel (%p630) target = $region64
        $region63: #{tpu_custom_call.1} parent=35 // pred_region
          %s634 = ssub.s32 128, 128
          %635 = vsyncadd %s612, %s634
          %s636 = smul.addr %s36, 4
          %s637 = sadd.s32 %s37, %s636
          %s638 = smul.addr %s637, 128
          %s639 = scalar_lea.hbm %s5, %s638
          %s641 = sshll.u32 %s615, 4
          %s642 = int_to_ptr.vmem [resolvable:$true] %s641
          %644 = dma.vmem_to_hbm [thread:$0]  %s642, 128, %s639, %s612
        $region64: #{tpu_custom_call.1} parent=35 // pred_fallthru
          _
      $region36: #{tpu_custom_call.1} parent=5 // pred_fallthru
        _
      %p645 = scmp.le.s32.totalorder 2, %s27
      // Predicated region
      $region65: #{tpu_custom_call.1} parent=5 // pred_check
        %p646 = pneg %p645
      $region66: #{tpu_custom_call.1} parent=5 // pred_check_branch
        %648 = sbr.rel (%p646) target = $region68
      $region67: #{tpu_custom_call.1} parent=5 // pred_region
        %s649 = ssub.s32 %s27, 2
        // Predicated region
        $region69: #{tpu_custom_call.1} parent=67 // pred_check
          %p650 = pneg %p172
        $region70: #{tpu_custom_call.1} parent=67 // pred_check_branch
          %652 = sbr.rel (%p650) target = $region72
        $region71: #{tpu_custom_call.1} parent=67 // pred_region
          %s653 = sand.u32 %s157, 1
          %s654 = scalar_lea.sflag [#allocation4], %s653
          %s655 = sand.u32 %s157, 1
          %s656 = smul.addr %s655, 16
          %s657 = scalar_lea.vmem [#allocation10], %s656
          %658 = dma.done %s654, 256
        $region72: #{tpu_custom_call.1} parent=67 // pred_fallthru
          _
        // Predicated region
        $region73: #{tpu_custom_call.1} parent=67 // pred_check
          %p659 = pneg %p200
        $region74: #{tpu_custom_call.1} parent=67 // pred_check_branch
          %661 = sbr.rel (%p659) target = $region76
        $region75: #{tpu_custom_call.1} parent=67 // pred_region
          %s662 = sand.u32 %s185, 1
          %s663 = scalar_lea.sflag [#allocation12], %s662
          %s664 = sand.u32 %s185, 1
          %s665 = smul.addr %s664, 8
          %s666 = scalar_lea.vmem [#allocation11], %s665
          %667 = dma.done %s663, 128
        $region76: #{tpu_custom_call.1} parent=67 // pred_fallthru
          _
      $region68: #{tpu_custom_call.1} parent=5 // pred_fallthru
        _
    $region6: #{tpu_custom_call.1} parent=1 // loop_footer
      %s31 = sadd.s32 1, %s27
    $region7: #{tpu_custom_call.1} parent=1 // loop_footer_branch
      %26 = sbr.rel target = $region3
    $region8: #{tpu_custom_call.1} parent=1 // loop_exit
      _
    %668 = vsyncpa [#allocation3], 1
    %s669 = scalar_lea.sflag [#allocation3], 1
    %670 = vsyncpa %s669, 1
    %671 = vsyncpa [#allocation6], 1
    %s672 = scalar_lea.sflag [#allocation6], 1
    %673 = vsyncpa %s672, 1
    %674 = vsyncpa [#allocation9], 1
    %s675 = scalar_lea.sflag [#allocation9], 1
    %676 = vsyncpa %s675, 1
    %677 = vsyncpa [#allocation4], 1
    %s678 = scalar_lea.sflag [#allocation4], 1
    %679 = vsyncpa %s678, 1
    %680 = vsyncpa [#allocation12], 1
    %s681 = scalar_lea.sflag [#allocation12], 1
    %682 = vsyncpa %s681, 1

</llo_original>
